<compile_context>
chip_gen: v7x
topology: tpu7x:2x2x1
jax: 0.10.0
libtpu: 0.0.40
codegen_flags: <defaults>
</compile_context>

<pallas_src>
import functools

import jax
import jax.numpy as jnp
from jax.experimental import pallas as pl
from jax.experimental.pallas import tpu as pltpu

_LANE = 128


def _round_up(x, m):
    return (x + m - 1) // m * m


def _is_v7x():
    kind = jax.devices()[0].device_kind.lower()
    return ("v7" in kind) or ("7x" in kind)


def _vmem_limit_bytes():
    """Per-generation scoped-VMEM budget (leave ~25% headroom for compiler scratch)."""
    cap = None
    try:
        cap = int(pltpu.get_tpu_info().vmem_capacity_bytes)
    except Exception:
        cap = None
    if not cap:
        cap = (64 if _is_v7x() else 128) * 1024 * 1024
    return int(cap * 3 // 4)


# ------------------------------- kernel ------------------------------------ #

def _fused_encoder_aug_kernel(a_ref, x_ref, w1_ref, b1_ref, w2_ref, b2_ref,
                              z_ref, g_ref, *,
                              assoc1_ax_first, assoc2_ax_first, n_nodes, inv_n):
    """One grid step == one augmented view (masks already applied in the wrapper).

    H = relu(A @ X @ W1 + b1); Z = A @ H @ W2 + b2; g = mean_nodes(Z).
    All intermediates stay in VMEM/vregs; matmuls run bf16 on the MXU with f32 acc.
    """
    f32, bf16 = jnp.float32, jnp.bfloat16

    av = a_ref[...]     # (Np, Np)  bf16, view-specific (edge mask pre-applied)
    xv = x_ref[...]     # (Np, Fp)  bf16, view-specific (feature mask pre-applied)
    w1 = w1_ref[...]    # bf16
    w2 = w2_ref[...]    # bf16

    # ---- layer 1: relu(A @ X @ W1 + b1); association chosen from padded dims ----
    if assoc1_ax_first:
        t = jnp.dot(av, xv, preferred_element_type=f32).astype(bf16)
        h = jnp.dot(t, w1, preferred_element_type=f32)
    else:
        t = jnp.dot(xv, w1, preferred_element_type=f32).astype(bf16)
        h = jnp.dot(av, t, preferred_element_type=f32)
    h = jnp.maximum(h + b1_ref[...], 0.0).astype(bf16)

    # ---- layer 2: A @ H @ W2 + b2 (no activation) ----
    if assoc2_ax_first:
        t2 = jnp.dot(av, h, preferred_element_type=f32).astype(bf16)
        z = jnp.dot(t2, w2, preferred_element_type=f32)
    else:
        t2 = jnp.dot(h, w2, preferred_element_type=f32).astype(bf16)
        z = jnp.dot(av, t2, preferred_element_type=f32)
    z = z + b2_ref[...]

    # Padded node rows only carry the broadcast bias; zero them so the stored Z
    # and the mean-pool below are exact.
    row_id = jax.lax.broadcasted_iota(jnp.int32, z.shape, 0)
    z = jnp.where(row_id < n_nodes, z, 0.0)

    z_ref[...] = z.astype(z_ref.dtype)
    # ---- fused graph readout: mean over true nodes (axis-0 reduction) ----
    g_ref[...] = (jnp.sum(z, axis=0, keepdims=True) * inv_n).astype(g_ref.dtype)


# ------------------------------- wrapper ------------------------------------ #

def encoder_aug_forward(a_norm, x, params, feat_mask, edge_mask):
    """Equivalent of Encoder_aug.forward -> (z1, z2, g1, g2), single fused pallas_call."""
    n = a_norm.shape[0]
    f_in = x.shape[1]
    hidden = params["w1"].shape[1]
    f_out = params["w2"].shape[1]

    # Zero-pad node & feature axes to multiples of 128: lane-dense loads/stores and
    # full MXU tiles.  Padding is mathematically exact (handled in-kernel for g).
    n_pad = _round_up(n, _LANE)
    fp_in = _round_up(f_in, _LANE)
    fp_hid = _round_up(hidden, _LANE)
    fp_out = _round_up(f_out, _LANE)

    def pad2(arr, rows, cols):
        return jnp.pad(arr, ((0, rows - arr.shape[0]), (0, cols - arr.shape[1])))

    bf16 = jnp.bfloat16

    # Pre-apply the augmentations (review item 1): view 0 = feature masking,
    # view 1 = edge dropping.  Stacked per-view arrays, bf16 for the MXU / HBM.
    x1, a1 = x * feat_mask, a_norm
    x2, a2 = x, a_norm * edge_mask
    a_views = jnp.stack([pad2(a1, n_pad, n_pad),
                         pad2(a2, n_pad, n_pad)]).astype(bf16)     # (2, Np, Np)
    x_views = jnp.stack([pad2(x1, n_pad, fp_in),
                         pad2(x2, n_pad, fp_in)]).astype(bf16)     # (2, Np, Fp_in)
    w1_p = pad2(params["w1"], fp_in, fp_hid).astype(bf16)
    w2_p = pad2(params["w2"], fp_hid, fp_out).astype(bf16)
    b1_p = pad2(params["b1"], 1, fp_hid).astype(jnp.float32)
    b2_p = pad2(params["b2"], 1, fp_out).astype(jnp.float32)

    kernel = functools.partial(
        _fused_encoder_aug_kernel,
        # Association decided on PADDED dims (review item 7).
        assoc1_ax_first=(fp_in <= fp_hid),    # (A@X)@W1 when padded F_in is smaller
        assoc2_ax_first=(fp_hid <= fp_out),   # (A@H)@W2 when padded hidden is smaller
        n_nodes=n,
        inv_n=1.0 / n,
    )

    views = 2
    flops = views * (2 * n_pad * n_pad * min(fp_in, fp_hid) + 2 * n_pad * fp_in * fp_hid
                     + 2 * n_pad * fp_hid * fp_out + 2 * n_pad * n_pad * min(fp_hid, fp_out))
    bytes_in = (2 * (views * n_pad * n_pad + views * n_pad * fp_in
                     + fp_in * fp_hid + fp_hid * fp_out)
                + 4 * (fp_hid + fp_out))
    bytes_out = 4 * views * (n_pad * fp_out + fp_out)

    # One view per TensorCore on v7x; plain serial 2-step loop elsewhere.
    dim_sem = (pltpu.CORE_PARALLEL,) if _is_v7x() else ("arbitrary",)

    z_all, g_all = pl.pallas_call(
        kernel,
        out_shape=(
            jax.ShapeDtypeStruct((views, n_pad, fp_out), jnp.float32),
            jax.ShapeDtypeStruct((views, 1, fp_out), jnp.float32),
        ),
        grid_spec=pltpu.PrefetchScalarGridSpec(
            num_scalar_prefetch=0,
            grid=(views,),
            in_specs=[
                pl.BlockSpec((None, n_pad, n_pad), lambda v: (v, 0, 0)),    # A per view
                pl.BlockSpec((None, n_pad, fp_in), lambda v: (v, 0, 0)),    # X per view
                # Constant-index inputs: single buffer (no wasted 2nd pipeline buf).
                pl.BlockSpec((fp_in, fp_hid), lambda v: (0, 0),
                             pipeline_mode=pl.Buffered(1)),                 # W1
                pl.BlockSpec((1, fp_hid), lambda v: (0, 0),
                             pipeline_mode=pl.Buffered(1)),                 # b1
                pl.BlockSpec((fp_hid, fp_out), lambda v: (0, 0),
                             pipeline_mode=pl.Buffered(1)),                 # W2
                pl.BlockSpec((1, fp_out), lambda v: (0, 0),
                             pipeline_mode=pl.Buffered(1)),                 # b2
            ],
            out_specs=(
                pl.BlockSpec((None, n_pad, fp_out), lambda v: (v, 0, 0)),   # Z per view
                pl.BlockSpec((None, 1, fp_out), lambda v: (v, 0, 0)),       # g per view
            ),
        ),
        compiler_params=pltpu.CompilerParams(
            dimension_semantics=dim_sem,
            vmem_limit_bytes=_vmem_limit_bytes(),
        ),
        cost_estimate=pl.CostEstimate(
            flops=flops, transcendentals=0,
            bytes_accessed=bytes_in + bytes_out,
        ),
    )(a_views, x_views, w1_p, b1_p, w2_p, b2_p)

    z1 = z_all[0, :n, :f_out]
    z2 = z_all[1, :n, :f_out]
    g1 = g_all[0, :, :f_out]
    g2 = g_all[1, :, :f_out]
    # TODO(synk): for production-scale N add a row-tiled grid axis over A's rows
    # (tm~256-512, weights resident, H in persistent VMEM scratch or two pallas_calls)
    # once N x N / N x fp_hid no longer fits the per-generation VMEM budget.
    # TODO(synk): the PyTorch while-loop retries augmentation when the two views'
    # node counts mismatch; with a fixed dense N x N graph they always match.
    return z1, z2, g1, g2


# --------------------------------- main ------------------------------------- #

if __name__ == "__main__":
    N, F_IN, HIDDEN, F_OUT = 16, 8, 32, 16

    key = jax.random.PRNGKey(0)
    k_x, k_adj, k_w1, k_w2, k_fm, k_em = jax.random.split(key, 6)

    # node features
    x = jax.random.normal(k_x, (N, F_IN), dtype=jnp.float32)

    # random symmetric adjacency with self-loops, row-normalized (setup glue)
    a_raw = (jax.random.uniform(k_adj, (N, N)) < 0.3).astype(jnp.float32)
    a_sym = jnp.maximum(a_raw, a_raw.T) + jnp.eye(N, dtype=jnp.float32)
    a_norm = a_sym / jnp.sum(a_sym, axis=1, keepdims=True)

    # deterministic encoder parameters
    params = {
        "w1": 0.1 * jax.random.normal(k_w1, (F_IN, HIDDEN), dtype=jnp.float32),
        "b1": jnp.zeros((1, HIDDEN), dtype=jnp.float32),
        "w2": 0.1 * jax.random.normal(k_w2, (HIDDEN, F_OUT), dtype=jnp.float32),
        "b2": jnp.zeros((1, F_OUT), dtype=jnp.float32),
    }

    # augmentors: view1 = feature masking (keep 0.8), view2 = edge dropping (keep 0.7)
    feat_mask = (jax.random.uniform(k_fm, (N, F_IN)) < 0.8).astype(jnp.float32)
    edge_mask = (jax.random.uniform(k_em, (N, N)) < 0.7).astype(jnp.float32)
    edge_mask = jnp.maximum(edge_mask, jnp.eye(N, dtype=jnp.float32))  # keep self-loops

    z1, z2, g1, g2 = encoder_aug_forward(a_norm, x, params, feat_mask, edge_mask)
    jax.block_until_ready((z1, z2, g1, g2))

    # ---- references ----
    assoc1 = _round_up(F_IN, _LANE) <= _round_up(HIDDEN, _LANE)
    assoc2 = _round_up(HIDDEN, _LANE) <= _round_up(F_OUT, _LANE)

    def ref_f32(av, xv):
        h = jnp.maximum(av @ xv @ params["w1"] + params["b1"], 0.0)
        z = av @ h @ params["w2"] + params["b2"]
        return z, jnp.mean(z, axis=0, keepdims=True)

    def ref_bf16(av, xv):
        """Mirrors the kernel's bf16-input / f32-accumulate math and association."""
        bf, f32 = jnp.bfloat16, jnp.float32
        a_b, x_b = av.astype(bf), xv.astype(bf)
        w1_b, w2_b = params["w1"].astype(bf), params["w2"].astype(bf)
        if assoc1:
            h = jnp.dot(jnp.dot(a_b, x_b, preferred_element_type=f32).astype(bf),
                        w1_b, preferred_element_type=f32)
        else:
            h = jnp.dot(a_b, jnp.dot(x_b, w1_b, preferred_element_type=f32).astype(bf),
                        preferred_element_type=f32)
        h = jnp.maximum(h + params["b1"], 0.0).astype(bf)
        if assoc2:
            z = jnp.dot(jnp.dot(a_b, h, preferred_element_type=f32).astype(bf),
                        w2_b, preferred_element_type=f32)
        else:
            z = jnp.dot(a_b, jnp.dot(h, w2_b, preferred_element_type=f32).astype(bf),
                        preferred_element_type=f32)
        z = z + params["b2"]
        return z, jnp.mean(z, axis=0, keepdims=True)

    z1_q, g1_q = ref_bf16(a_norm, x * feat_mask)
    z2_q, g2_q = ref_bf16(a_norm * edge_mask, x)
    z1_r, g1_r = ref_f32(a_norm, x * feat_mask)
    z2_r, g2_r = ref_f32(a_norm * edge_mask, x)

    assert z1.shape == (N, F_OUT) and z2.shape == (N, F_OUT)
    assert g1.shape == (1, F_OUT) and g2.shape == (1, F_OUT)

    # Tight check vs a reference mirroring the kernel's bf16/f32 math.
    for got, want in ((z1, z1_q), (z2, z2_q), (g1, g1_q), (g2, g2_q)):
        err = float(jnp.max(jnp.abs(got - want)))
        assert jnp.allclose(got, want, atol=2e-4, rtol=2e-3), err
    # Loose check vs the pure-f32 PyTorch-equivalent math (bf16 quantization noise).
    for got, want in ((z1, z1_r), (z2, z2_r), (g1, g1_r), (g2, g2_r)):
        err = float(jnp.max(jnp.abs(got - want)))
        assert jnp.allclose(got, want, atol=1e-2, rtol=5e-2), err

    print("KERNEL_OK")
</pallas_src>

<mosaic_0001>
module attributes {stable_mosaic.version = 11 : i64} {
  func.func @_fused_encoder_aug_kernel(%arg0: i32, %arg1: memref<1x128x128xbf16, #tpu.memory_space<vmem>>, %arg2: memref<1x128x128xbf16, #tpu.memory_space<vmem>>, %arg3: memref<128x128xbf16, #tpu.memory_space<vmem>>, %arg4: memref<1x128xf32, #tpu.memory_space<vmem>>, %arg5: memref<128x128xbf16, #tpu.memory_space<vmem>>, %arg6: memref<1x128xf32, #tpu.memory_space<vmem>>, %arg7: memref<1x128x128xf32, #tpu.memory_space<vmem>>, %arg8: memref<1x1x128xf32, #tpu.memory_space<vmem>>) attributes {dimension_semantics = [#tpu.dimension_semantics<arbitrary>], iteration_bounds = array<i64: 2>, scalar_prefetch = 0 : i64, scratch_operands = 0 : i64, tpu.core_type = #tpu.core_type<tc>, window_params = [{transform_indices = @transform_0, window_bounds = array<i64: 1, 128, 128>}, {transform_indices = @transform_1, window_bounds = array<i64: 1, 128, 128>}, {pipeline_mode = #tpu.pipeline_mode<synchronous>, transform_indices = @transform_2, window_bounds = array<i64: 128, 128>}, {pipeline_mode = #tpu.pipeline_mode<synchronous>, transform_indices = @transform_3, window_bounds = array<i64: 1, 128>}, {pipeline_mode = #tpu.pipeline_mode<synchronous>, transform_indices = @transform_4, window_bounds = array<i64: 128, 128>}, {pipeline_mode = #tpu.pipeline_mode<synchronous>, transform_indices = @transform_5, window_bounds = array<i64: 1, 128>}, {transform_indices = @transform_6, window_bounds = array<i64: 1, 128, 128>}, {transform_indices = @transform_7, window_bounds = array<i64: 1, 1, 128>}]} {
    %c0 = arith.constant 0 : index
    %c0_0 = arith.constant 0 : index
    %c0_1 = arith.constant 0 : index
    %0 = vector.load %arg1[%c0, %c0_0, %c0_1] : memref<1x128x128xbf16, #tpu.memory_space<vmem>>, vector<1x128x128xbf16>
    %1 = vector.shape_cast %0 : vector<1x128x128xbf16> to vector<128x128xbf16>
    %c0_2 = arith.constant 0 : index
    %c0_3 = arith.constant 0 : index
    %c0_4 = arith.constant 0 : index
    %2 = vector.load %arg2[%c0_2, %c0_3, %c0_4] : memref<1x128x128xbf16, #tpu.memory_space<vmem>>, vector<1x128x128xbf16>
    %3 = vector.shape_cast %2 : vector<1x128x128xbf16> to vector<128x128xbf16>
    %c0_5 = arith.constant 0 : index
    %c0_6 = arith.constant 0 : index
    %4 = vector.load %arg3[%c0_5, %c0_6] : memref<128x128xbf16, #tpu.memory_space<vmem>>, vector<128x128xbf16>
    %c0_7 = arith.constant 0 : index
    %c0_8 = arith.constant 0 : index
    %5 = vector.load %arg5[%c0_7, %c0_8] : memref<128x128xbf16, #tpu.memory_space<vmem>>, vector<128x128xbf16>
    %cst = arith.constant dense<0.000000e+00> : vector<128x128xf32>
    %6 = tpu.matmul %1, %3, %cst {dimension_numbers = #tpu.dot_dimension_numbers<[1], [0], [0], [1], [0, 0, 1, 1], [], []>} : vector<128x128xbf16>, vector<128x128xbf16>, vector<128x128xf32> -> vector<128x128xf32>
    %7 = arith.truncf %6 : vector<128x128xf32> to vector<128x128xbf16>
    %cst_9 = arith.constant dense<0.000000e+00> : vector<128x128xf32>
    %8 = tpu.matmul %7, %4, %cst_9 {dimension_numbers = #tpu.dot_dimension_numbers<[1], [0], [0], [1], [0, 0, 1, 1], [], []>} : vector<128x128xbf16>, vector<128x128xbf16>, vector<128x128xf32> -> vector<128x128xf32>
    %c0_10 = arith.constant 0 : index
    %c0_11 = arith.constant 0 : index
    %9 = vector.load %arg4[%c0_10, %c0_11] : memref<1x128xf32, #tpu.memory_space<vmem>>, vector<1x128xf32>
    %10 = vector.broadcast %9 : vector<1x128xf32> to vector<128x128xf32>
    %11 = arith.addf %8, %10 : vector<128x128xf32>
    %cst_12 = arith.constant 0.000000e+00 : f32
    %12 = vector.broadcast %cst_12 : f32 to vector<128x128xf32>
    %13 = arith.maximumf %11, %12 : vector<128x128xf32>
    %14 = arith.truncf %13 : vector<128x128xf32> to vector<128x128xbf16>
    %cst_13 = arith.constant dense<0.000000e+00> : vector<128x128xf32>
    %15 = tpu.matmul %1, %14, %cst_13 {dimension_numbers = #tpu.dot_dimension_numbers<[1], [0], [0], [1], [0, 0, 1, 1], [], []>} : vector<128x128xbf16>, vector<128x128xbf16>, vector<128x128xf32> -> vector<128x128xf32>
    %16 = arith.truncf %15 : vector<128x128xf32> to vector<128x128xbf16>
    %cst_14 = arith.constant dense<0.000000e+00> : vector<128x128xf32>
    %17 = tpu.matmul %16, %5, %cst_14 {dimension_numbers = #tpu.dot_dimension_numbers<[1], [0], [0], [1], [0, 0, 1, 1], [], []>} : vector<128x128xbf16>, vector<128x128xbf16>, vector<128x128xf32> -> vector<128x128xf32>
    %c0_15 = arith.constant 0 : index
    %c0_16 = arith.constant 0 : index
    %18 = vector.load %arg6[%c0_15, %c0_16] : memref<1x128xf32, #tpu.memory_space<vmem>>, vector<1x128xf32>
    %19 = vector.broadcast %18 : vector<1x128xf32> to vector<128x128xf32>
    %20 = arith.addf %17, %19 : vector<128x128xf32>
    %21 = tpu.iota {dimensions = array<i32: 0>} : vector<128x128xi32>
    %c16_i32 = arith.constant 16 : i32
    %22 = vector.broadcast %c16_i32 : i32 to vector<128x128xi32>
    %23 = arith.cmpi slt, %21, %22 : vector<128x128xi32>
    %cst_17 = arith.constant 0.000000e+00 : f32
    %24 = vector.broadcast %cst_17 : f32 to vector<128x128xf32>
    %25 = arith.select %23, %20, %24 : vector<128x128xi1>, vector<128x128xf32>
    %c0_18 = arith.constant 0 : index
    %c0_19 = arith.constant 0 : index
    %c0_20 = arith.constant 0 : index
    %26 = vector.load %arg7[%c0_18, %c0_19, %c0_20] : memref<1x128x128xf32, #tpu.memory_space<vmem>>, vector<1x128x128xf32>
    %27 = vector.shape_cast %26 : vector<1x128x128xf32> to vector<128x128xf32>
    %28 = vector.shape_cast %25 : vector<128x128xf32> to vector<1x128x128xf32>
    tpu.vector_store %arg7[%c0_18, %c0_19, %c0_20], %28 {strides = array<i32>} : memref<1x128x128xf32, #tpu.memory_space<vmem>>, vector<1x128x128xf32>,
    %cst_21 = arith.constant dense<0.000000e+00> : vector<128xf32>
    %29 = vector.multi_reduction <add>, %25, %cst_21 [0] : vector<128x128xf32> to vector<128xf32>
    %30 = vector.shape_cast %29 : vector<128xf32> to vector<1x128xf32>
    %cst_22 = arith.constant 6.250000e-02 : f32
    %31 = vector.broadcast %cst_22 : f32 to vector<1x128xf32>
    %32 = arith.mulf %30, %31 : vector<1x128xf32>
    %c0_23 = arith.constant 0 : index
    %c0_24 = arith.constant 0 : index
    %c0_25 = arith.constant 0 : index
    %33 = vector.load %arg8[%c0_23, %c0_24, %c0_25] : memref<1x1x128xf32, #tpu.memory_space<vmem>>, vector<1x1x128xf32>
    %34 = vector.shape_cast %33 : vector<1x1x128xf32> to vector<1x128xf32>
    %35 = vector.shape_cast %32 : vector<1x128xf32> to vector<1x1x128xf32>
    tpu.vector_store %arg8[%c0_23, %c0_24, %c0_25], %35 {strides = array<i32>} : memref<1x1x128xf32, #tpu.memory_space<vmem>>, vector<1x1x128xf32>,
    return
  }
  func.func @transform_0(%arg0: i32) -> (i32, i32, i32) {
    %c0_i32 = arith.constant 0 : i32
    %c0_i32_0 = arith.constant 0 : i32
    %c0_i32_1 = arith.constant 0 : i32
    return %arg0, %c0_i32, %c0_i32_0 : i32, i32, i32
  }
  func.func @transform_1(%arg0: i32) -> (i32, i32, i32) {
    %c0_i32 = arith.constant 0 : i32
    %c0_i32_0 = arith.constant 0 : i32
    %c0_i32_1 = arith.constant 0 : i32
    return %arg0, %c0_i32, %c0_i32_0 : i32, i32, i32
  }
  func.func @transform_2(%arg0: i32) -> (i32, i32) {
    %c0_i32 = arith.constant 0 : i32
    %c0_i32_0 = arith.constant 0 : i32
    %c0_i32_1 = arith.constant 0 : i32
    return %c0_i32, %c0_i32_0 : i32, i32
  }
  func.func @transform_3(%arg0: i32) -> (i32, i32) {
    %c0_i32 = arith.constant 0 : i32
    %c0_i32_0 = arith.constant 0 : i32
    %c0_i32_1 = arith.constant 0 : i32
    return %c0_i32, %c0_i32_0 : i32, i32
  }
  func.func @transform_4(%arg0: i32) -> (i32, i32) {
    %c0_i32 = arith.constant 0 : i32
    %c0_i32_0 = arith.constant 0 : i32
    %c0_i32_1 = arith.constant 0 : i32
    return %c0_i32, %c0_i32_0 : i32, i32
  }
  func.func @transform_5(%arg0: i32) -> (i32, i32) {
    %c0_i32 = arith.constant 0 : i32
    %c0_i32_0 = arith.constant 0 : i32
    %c0_i32_1 = arith.constant 0 : i32
    return %c0_i32, %c0_i32_0 : i32, i32
  }
  func.func @transform_6(%arg0: i32) -> (i32, i32, i32) {
    %c0_i32 = arith.constant 0 : i32
    %c0_i32_0 = arith.constant 0 : i32
    %c0_i32_1 = arith.constant 0 : i32
    return %arg0, %c0_i32, %c0_i32_0 : i32, i32, i32
  }
  func.func @transform_7(%arg0: i32) -> (i32, i32, i32) {
    %c0_i32 = arith.constant 0 : i32
    %c0_i32_0 = arith.constant 0 : i32
    %c0_i32_1 = arith.constant 0 : i32
    return %arg0, %c0_i32, %c0_i32_0 : i32, i32, i32
  }
}

</mosaic_0001>

<llo_original>
// kernel: tpu_custom_call.1
$region0: #{tpu_custom_call.1}
  #allocation0 [shape = 'u32[]', space=smem, size = 0x4, offset = 0x4, fixed_abs, tag = 'smem constant byte address 0x4 - core index']
  #allocation1 [shape = 'u32[144,128]{1,0:T(1,128)}', space=vmem, size = 0x12000, scoped, tag = 'internal scratch']
  %s0 = inlined_call_operand.hbm [shape: bf16[2,128,128], index: 0, kind: input, shape index: {}]
  %s1 = inlined_call_operand.hbm [shape: bf16[2,128,128], index: 1, kind: input, shape index: {}]
  %s2 = inlined_call_operand.hbm [shape: bf16[128,128], index: 2, kind: input, shape index: {}]
  %s3 = inlined_call_operand.hbm [shape: f32[1,128], index: 3, kind: input, shape index: {}]
  %s4 = inlined_call_operand.hbm [shape: bf16[128,128], index: 4, kind: input, shape index: {}]
  %s5 = inlined_call_operand.hbm [shape: f32[1,128], index: 5, kind: input, shape index: {}]
  %s6 = inlined_call_operand.hbm [shape: f32[2,128,128], index: 6, kind: output, shape index: {0}]
  %s7 = inlined_call_operand.hbm [shape: f32[2,1,128], index: 7, kind: output, shape index: {1}]
  %8 = xla_tuple %s6, %s7
  %s9 = sld [smem:[#allocation0]]
  $region89: #{tpu_custom_call.1} parent=0
    _
  %s11 = ssub.s32 1, %s9
  %s12 = scalar_select 0, %s11, %s9
  $region1: #{tpu_custom_call.1} parent=0
    #allocation2 [shape = 'u8[65536]{0}', space=vmem, size = 0x10000, scoped, tag = 'input window, operand 0']
    #allocation3 [shape = 's32[2]{0}', space=sflag, size = 0x8, scoped, tag = 'scoped memory for tpu_custom_call.1']
    #allocation4 [shape = 's32[2]{0}', space=sflag, size = 0x8, scoped, tag = 'scoped memory for tpu_custom_call.1']
    #allocation5 [shape = 'u8[65536]{0}', space=vmem, size = 0x10000, scoped, tag = 'input window, operand 1']
    #allocation6 [shape = 's32[2]{0}', space=sflag, size = 0x8, scoped, tag = 'scoped memory for tpu_custom_call.1']
    #allocation7 [shape = 'u8[32768]{0}', space=vmem, size = 0x8000, scoped, tag = 'input window, operand 2, single buffered']
    #allocation8 [shape = 'u8[512]{0}', space=vmem, size = 0x400, scoped, tag = 'input window, operand 3, single buffered']
    #allocation9 [shape = 's32[1]{0}', space=sflag, size = 0x4, scoped, tag = 'scoped memory for tpu_custom_call.1']
    #allocation10 [shape = 'u8[32768]{0}', space=vmem, size = 0x8000, scoped, tag = 'input window, operand 4, single buffered']
    #allocation11 [shape = 'u8[512]{0}', space=vmem, size = 0x400, scoped, tag = 'input window, operand 5, single buffered']
    #allocation12 [shape = 's32[1]{0}', space=sflag, size = 0x4, scoped, tag = 'scoped memory for tpu_custom_call.1']
    #allocation13 [shape = 'u8[131072]{0}', space=vmem, size = 0x20000, scoped, tag = 'output window, operand 0']
    #allocation14 [shape = 'u8[1024]{0}', space=vmem, size = 0x400, scoped, tag = 'output window, operand 1']
    #allocation15 [shape = 's32[2]{0}', space=sflag, size = 0x8, scoped, tag = 'scoped memory for tpu_custom_call.1']
    %13 = vsyncpa [#allocation3], 0
    %s14 = scalar_lea.sflag [#allocation3], 1
    %15 = vsyncpa %s14, 0
    %16 = vsyncpa [#allocation6], 0
    %s17 = scalar_lea.sflag [#allocation6], 1
    %18 = vsyncpa %s17, 0
    %19 = vsyncpa [#allocation9], 0
    %20 = vsyncpa [#allocation12], 0
    %21 = vsyncpa [#allocation4], 0
    %s22 = scalar_lea.sflag [#allocation4], 1
    %23 = vsyncpa %s22, 0
    %24 = vsyncpa [#allocation15], 0
    %s25 = scalar_lea.sflag [#allocation15], 1
    %26 = vsyncpa %s25, 0
    loop: start=0, step=1, limit=4
    $region2: #{tpu_custom_call.1} parent=1 // loop_pre_header
      _
    $region3: #{tpu_custom_call.1} parent=1 // loop_header
      %s28 = sphi 0, %s32
      %p29 = scmp.ge.s32.totalorder %s28, 4
      %s38 = sphi 0, %s40
      %s41 = sphi 0, %s38
      %s42 = sphi 0, %s41
      %s58 = sphi 0, %s42
      %s64 = sphi 0, %s66
      %s67 = sphi 0, %s64
      %s68 = sphi 0, %s67
      %s84 = sphi 0, %s68
      %s88 = sphi 0, %s88
      %s90 = sphi 0, %s88
      %s91 = sphi 0, %s90
      %s105 = sphi 0, %s91
      %s109 = sphi 0, %s109
      %s111 = sphi 0, %s109
      %s112 = sphi 0, %s111
      %s126 = sphi 0, %s112
      %s130 = sphi 0, %s130
      %s132 = sphi 0, %s130
      %s133 = sphi 0, %s132
      %s147 = sphi 0, %s133
      %s151 = sphi 0, %s151
      %s153 = sphi 0, %s151
      %s154 = sphi 0, %s153
      %s168 = sphi 0, %s154
      %s174 = sphi 0, %s176
      %s177 = sphi 0, %s174
      %s178 = sphi 0, %s177
      %s194 = sphi 0, %s178
      %s200 = sphi 0, %s202
      %s203 = sphi 0, %s200
      %s204 = sphi 0, %s203
      %s220 = sphi 0, %s204
    $region4: #{tpu_custom_call.1} parent=1 // loop_header_branch
      %31 = sbr.rel (%p29) target = $region8
    $region5: #{tpu_custom_call.1} parent=1 // loop_body
      %s33 = ssub.s32 %s28, 1
      %s34 = ssub.s32 %s28, 2
      %s35 = sadd.s32 %s28, 1
      %s36 = ssub.s32 %s28, %s35
      %p37 = scmp.eq.s32.totalorder %s36, 0
      %s39 = sadd.s32 %s38, 1
      %s40 = scalar_select %p37, %s38, %s39
      %p43 = pneg %p37
      %p44 = scmp.eq.s32.totalorder %s28, 1
      %p45 = por %p43, %p44
      %p46 = scmp.ne.s32.totalorder %s38, %s41
      %p47 = scmp.eq.s32.totalorder %s28, 0
      %p48 = por %p46, %p47
      %p49 = scmp.ne.s32.totalorder %s38, %s41
      %p50 = scmp.eq.s32.totalorder %s33, 1
      %p51 = por %p49, %p50
      %p52 = scmp.ne.s32.totalorder %s41, %s42
      %p53 = scmp.eq.s32.totalorder %s33, 0
      %p54 = por %p52, %p53
      %p55 = scmp.ne.s32.totalorder %s41, %s42
      %p56 = scmp.eq.s32.totalorder %s34, 1
      %p57 = por %p55, %p56
      %p59 = scmp.ne.s32.totalorder %s42, %s58
      %p60 = scmp.eq.s32.totalorder %s34, 0
      %p61 = por %p59, %p60
      %s62 = ssub.s32 %s28, %s35
      %p63 = scmp.eq.s32.totalorder %s62, 0
      %s65 = sadd.s32 %s64, 1
      %s66 = scalar_select %p63, %s64, %s65
      %p69 = pneg %p63
      %p70 = scmp.eq.s32.totalorder %s28, 1
      %p71 = por %p69, %p70
      %p72 = scmp.ne.s32.totalorder %s64, %s67
      %p73 = scmp.eq.s32.totalorder %s28, 0
      %p74 = por %p72, %p73
      %p75 = scmp.ne.s32.totalorder %s64, %s67
      %p76 = scmp.eq.s32.totalorder %s33, 1
      %p77 = por %p75, %p76
      %p78 = scmp.ne.s32.totalorder %s67, %s68
      %p79 = scmp.eq.s32.totalorder %s33, 0
      %p80 = por %p78, %p79
      %p81 = scmp.ne.s32.totalorder %s67, %s68
      %p82 = scmp.eq.s32.totalorder %s34, 1
      %p83 = por %p81, %p82
      %p85 = scmp.ne.s32.totalorder %s68, %s84
      %p86 = scmp.eq.s32.totalorder %s34, 0
      %p87 = por %p85, %p86
      %s89 = sadd.s32 %s88, 1
      %p92 = scmp.eq.s32.totalorder %s28, 1
      %p93 = scmp.ne.s32.totalorder %s88, %s90
      %p94 = scmp.eq.s32.totalorder %s28, 0
      %p95 = por %p93, %p94
      %p96 = scmp.ne.s32.totalorder %s88, %s90
      %p97 = scmp.eq.s32.totalorder %s33, 1
      %p98 = por %p96, %p97
      %p99 = scmp.ne.s32.totalorder %s90, %s91
      %p100 = scmp.eq.s32.totalorder %s33, 0
      %p101 = por %p99, %p100
      %p102 = scmp.ne.s32.totalorder %s90, %s91
      %p103 = scmp.eq.s32.totalorder %s34, 1
      %p104 = por %p102, %p103
      %p106 = scmp.ne.s32.totalorder %s91, %s105
      %p107 = scmp.eq.s32.totalorder %s34, 0
      %p108 = por %p106, %p107
      %s110 = sadd.s32 %s109, 1
      %p113 = scmp.eq.s32.totalorder %s28, 1
      %p114 = scmp.ne.s32.totalorder %s109, %s111
      %p115 = scmp.eq.s32.totalorder %s28, 0
      %p116 = por %p114, %p115
      %p117 = scmp.ne.s32.totalorder %s109, %s111
      %p118 = scmp.eq.s32.totalorder %s33, 1
      %p119 = por %p117, %p118
      %p120 = scmp.ne.s32.totalorder %s111, %s112
      %p121 = scmp.eq.s32.totalorder %s33, 0
      %p122 = por %p120, %p121
      %p123 = scmp.ne.s32.totalorder %s111, %s112
      %p124 = scmp.eq.s32.totalorder %s34, 1
      %p125 = por %p123, %p124
      %p127 = scmp.ne.s32.totalorder %s112, %s126
      %p128 = scmp.eq.s32.totalorder %s34, 0
      %p129 = por %p127, %p128
      %s131 = sadd.s32 %s130, 1
      %p134 = scmp.eq.s32.totalorder %s28, 1
      %p135 = scmp.ne.s32.totalorder %s130, %s132
      %p136 = scmp.eq.s32.totalorder %s28, 0
      %p137 = por %p135, %p136
      %p138 = scmp.ne.s32.totalorder %s130, %s132
      %p139 = scmp.eq.s32.totalorder %s33, 1
      %p140 = por %p138, %p139
      %p141 = scmp.ne.s32.totalorder %s132, %s133
      %p142 = scmp.eq.s32.totalorder %s33, 0
      %p143 = por %p141, %p142
      %p144 = scmp.ne.s32.totalorder %s132, %s133
      %p145 = scmp.eq.s32.totalorder %s34, 1
      %p146 = por %p144, %p145
      %p148 = scmp.ne.s32.totalorder %s133, %s147
      %p149 = scmp.eq.s32.totalorder %s34, 0
      %p150 = por %p148, %p149
      %s152 = sadd.s32 %s151, 1
      %p155 = scmp.eq.s32.totalorder %s28, 1
      %p156 = scmp.ne.s32.totalorder %s151, %s153
      %p157 = scmp.eq.s32.totalorder %s28, 0
      %p158 = por %p156, %p157
      %p159 = scmp.ne.s32.totalorder %s151, %s153
      %p160 = scmp.eq.s32.totalorder %s33, 1
      %p161 = por %p159, %p160
      %p162 = scmp.ne.s32.totalorder %s153, %s154
      %p163 = scmp.eq.s32.totalorder %s33, 0
      %p164 = por %p162, %p163
      %p165 = scmp.ne.s32.totalorder %s153, %s154
      %p166 = scmp.eq.s32.totalorder %s34, 1
      %p167 = por %p165, %p166
      %p169 = scmp.ne.s32.totalorder %s154, %s168
      %p170 = scmp.eq.s32.totalorder %s34, 0
      %p171 = por %p169, %p170
      %s172 = ssub.s32 %s28, %s35
      %p173 = scmp.eq.s32.totalorder %s172, 0
      %s175 = sadd.s32 %s174, 1
      %s176 = scalar_select %p173, %s174, %s175
      %p179 = pneg %p173
      %p180 = scmp.eq.s32.totalorder %s28, 1
      %p181 = por %p179, %p180
      %p182 = scmp.ne.s32.totalorder %s174, %s177
      %p183 = scmp.eq.s32.totalorder %s28, 0
      %p184 = por %p182, %p183
      %p185 = scmp.ne.s32.totalorder %s174, %s177
      %p186 = scmp.eq.s32.totalorder %s33, 1
      %p187 = por %p185, %p186
      %p188 = scmp.ne.s32.totalorder %s177, %s178
      %p189 = scmp.eq.s32.totalorder %s33, 0
      %p190 = por %p188, %p189
      %p191 = scmp.ne.s32.totalorder %s177, %s178
      %p192 = scmp.eq.s32.totalorder %s34, 1
      %p193 = por %p191, %p192
      %p195 = scmp.ne.s32.totalorder %s178, %s194
      %p196 = scmp.eq.s32.totalorder %s34, 0
      %p197 = por %p195, %p196
      %s198 = ssub.s32 %s28, %s35
      %p199 = scmp.eq.s32.totalorder %s198, 0
      %s201 = sadd.s32 %s200, 1
      %s202 = scalar_select %p199, %s200, %s201
      %p205 = pneg %p199
      %p206 = scmp.eq.s32.totalorder %s28, 1
      %p207 = por %p205, %p206
      %p208 = scmp.ne.s32.totalorder %s200, %s203
      %p209 = scmp.eq.s32.totalorder %s28, 0
      %p210 = por %p208, %p209
      %p211 = scmp.ne.s32.totalorder %s200, %s203
      %p212 = scmp.eq.s32.totalorder %s33, 1
      %p213 = por %p211, %p212
      %p214 = scmp.ne.s32.totalorder %s203, %s204
      %p215 = scmp.eq.s32.totalorder %s33, 0
      %p216 = por %p214, %p215
      %p217 = scmp.ne.s32.totalorder %s203, %s204
      %p218 = scmp.eq.s32.totalorder %s34, 1
      %p219 = por %p217, %p218
      %p221 = scmp.ne.s32.totalorder %s204, %s220
      %p222 = scmp.eq.s32.totalorder %s34, 0
      %p223 = por %p221, %p222
      %p224 = scmp.le.s32.totalorder 1, %s28
      %p225 = scmp.lt.s32.totalorder %s28, 3
      %p226 = pnand %p224, %p225
      %p227 = pneg %p226
      // Predicated region
      $region9: #{tpu_custom_call.1} parent=5 // pred_check
        _
      $region10: #{tpu_custom_call.1} parent=5 // pred_check_branch
        %229 = sbr.rel (%p226) target = $region12
      $region11: #{tpu_custom_call.1} parent=5 // pred_region
        %s230 = ssub.s32 %s28, 1
        // Predicated region
        $region13: #{tpu_custom_call.1} parent=11 // pred_check
          %p231 = pneg %p101
        $region14: #{tpu_custom_call.1} parent=11 // pred_check_branch
          %233 = sbr.rel (%p231) target = $region16
        $region15: #{tpu_custom_call.1} parent=11 // pred_region
          %s235 = ssub.s32 1024, 1024
          %236 = vsyncadd [#allocation6], %s235
          %s237 = sshll.u32 [#allocation7], 4
          %s238 = int_to_ptr.vmem [resolvable:$true] %s237
          %243 = dma.hbm_to_vmem [thread:$0]  %s2, 1024, %s238, [#allocation6], 64, 64, 4
        $region16: #{tpu_custom_call.1} parent=11 // pred_fallthru
          _
        // Predicated region
        $region17: #{tpu_custom_call.1} parent=11 // pred_check
          %p244 = pneg %p122
        $region18: #{tpu_custom_call.1} parent=11 // pred_check_branch
          %246 = sbr.rel (%p244) target = $region20
        $region19: #{tpu_custom_call.1} parent=11 // pred_region
          %s248 = ssub.s32 16, 16
          %249 = vsyncadd [#allocation9], %s248
          %s251 = sshll.u32 [#allocation8], 4
          %s252 = int_to_ptr.vmem [resolvable:$true] %s251
          %254 = dma.hbm_to_vmem [thread:$0]  %s3, 16, %s252, [#allocation9]
        $region20: #{tpu_custom_call.1} parent=11 // pred_fallthru
          _
        // Predicated region
        $region21: #{tpu_custom_call.1} parent=11 // pred_check
          %p255 = pneg %p143
        $region22: #{tpu_custom_call.1} parent=11 // pred_check_branch
          %257 = sbr.rel (%p255) target = $region24
        $region23: #{tpu_custom_call.1} parent=11 // pred_region
          %s259 = ssub.s32 1024, 1024
          %260 = vsyncadd [#allocation9], %s259
          %s261 = sshll.u32 [#allocation10], 4
          %s262 = int_to_ptr.vmem [resolvable:$true] %s261
          %267 = dma.hbm_to_vmem [thread:$0]  %s4, 1024, %s262, [#allocation9], 64, 64, 4
        $region24: #{tpu_custom_call.1} parent=11 // pred_fallthru
          _
        // Predicated region
        $region25: #{tpu_custom_call.1} parent=11 // pred_check
          %p268 = pneg %p164
        $region26: #{tpu_custom_call.1} parent=11 // pred_check_branch
          %270 = sbr.rel (%p268) target = $region28
        $region27: #{tpu_custom_call.1} parent=11 // pred_region
          %s272 = ssub.s32 16, 16
          %273 = vsyncadd [#allocation12], %s272
          %s275 = sshll.u32 [#allocation11], 4
          %s276 = int_to_ptr.vmem [resolvable:$true] %s275
          %278 = dma.hbm_to_vmem [thread:$0]  %s5, 16, %s276, [#allocation12]
        $region28: #{tpu_custom_call.1} parent=11 // pred_fallthru
          _
      $region12: #{tpu_custom_call.1} parent=5 // pred_fallthru
        _
      %p279 = scmp.lt.s32.totalorder %s28, 2
      // Predicated region
      $region29: #{tpu_custom_call.1} parent=5 // pred_check
        %p280 = pneg %p279
      $region30: #{tpu_custom_call.1} parent=5 // pred_check_branch
        %282 = sbr.rel (%p280) target = $region32
      $region31: #{tpu_custom_call.1} parent=5 // pred_region
        // Predicated region
        $region33: #{tpu_custom_call.1} parent=31 // pred_check
          %p283 = pneg %p48
        $region34: #{tpu_custom_call.1} parent=31 // pred_check_branch
          %285 = sbr.rel (%p283) target = $region36
        $region35: #{tpu_custom_call.1} parent=31 // pred_region
          %s286 = sand.u32 %s38, 1
          %s287 = scalar_lea.sflag [#allocation3], %s286
          %s288 = sand.u32 %s38, 1
          %s289 = smul.addr %s288, 64
          %s290 = scalar_lea.vmem [#allocation2], %s289
          %s292 = ssub.s32 1024, 1024
          %293 = vsyncadd %s287, %s292
          %s294 = smul.addr %s28, 16
          %s295 = smul.addr %s294, 64
          %s296 = scalar_lea.hbm %s0, %s295
          %s297 = sshll.u32 %s290, 4
          %s298 = int_to_ptr.vmem [resolvable:$true] %s297
          %303 = dma.hbm_to_vmem [thread:$0]  %s296, 1024, %s298, %s287, 64, 64, 4
        $region36: #{tpu_custom_call.1} parent=31 // pred_fallthru
          _
        // Predicated region
        $region37: #{tpu_custom_call.1} parent=31 // pred_check
          %p304 = pneg %p74
        $region38: #{tpu_custom_call.1} parent=31 // pred_check_branch
          %306 = sbr.rel (%p304) target = $region40
        $region39: #{tpu_custom_call.1} parent=31 // pred_region
          %s307 = sand.u32 %s28, 1
          %s308 = scalar_lea.sflag [#allocation6], %s307
          %s309 = sand.u32 %s64, 1
          %s310 = smul.addr %s309, 64
          %s311 = scalar_lea.vmem [#allocation5], %s310
          %s313 = ssub.s32 1024, 1024
          %314 = vsyncadd %s308, %s313
          %s315 = smul.addr %s28, 16
          %s316 = smul.addr %s315, 64
          %s317 = scalar_lea.hbm %s1, %s316
          %s318 = sshll.u32 %s311, 4
          %s319 = int_to_ptr.vmem [resolvable:$true] %s318
          %324 = dma.hbm_to_vmem [thread:$0]  %s317, 1024, %s319, %s308, 64, 64, 4
        $region40: #{tpu_custom_call.1} parent=31 // pred_fallthru
          _
      $region32: #{tpu_custom_call.1} parent=5 // pred_fallthru
        _
      %p325 = scmp.le.s32.totalorder 1, %s28
      %p326 = scmp.lt.s32.totalorder %s28, 3
      %p327 = pnand %p325, %p326
      %p328 = pneg %p327
      // Predicated region
      $region41: #{tpu_custom_call.1} parent=5 // pred_check
        _
      $region42: #{tpu_custom_call.1} parent=5 // pred_check_branch
        %330 = sbr.rel (%p327) target = $region44
      $region43: #{tpu_custom_call.1} parent=5 // pred_region
        %s331 = ssub.s32 %s28, 1
        %s332 = sand.u32 %s41, 1
        %s333 = scalar_lea.sflag [#allocation3], %s332
        %s334 = sand.u32 %s41, 1
        %s335 = smul.addr %s334, 64
        %s336 = scalar_lea.vmem [#allocation2], %s335
        // Predicated region
        $region45: #{tpu_custom_call.1} parent=43 // pred_check
          %p337 = pneg %p54
        $region46: #{tpu_custom_call.1} parent=43 // pred_check_branch
          %339 = sbr.rel (%p337) target = $region48
        $region47: #{tpu_custom_call.1} parent=43 // pred_region
          %340 = dma.done %s333, 1024
        $region48: #{tpu_custom_call.1} parent=43 // pred_fallthru
          _
        %s341 = sand.u32 %s33, 1
        %s342 = scalar_lea.sflag [#allocation6], %s341
        %s343 = sand.u32 %s67, 1
        %s344 = smul.addr %s343, 64
        %s345 = scalar_lea.vmem [#allocation5], %s344
        // Predicated region
        $region49: #{tpu_custom_call.1} parent=43 // pred_check
          %p346 = pneg %p80
        $region50: #{tpu_custom_call.1} parent=43 // pred_check_branch
          %348 = sbr.rel (%p346) target = $region52
        $region51: #{tpu_custom_call.1} parent=43 // pred_region
          %349 = dma.done %s342, 1024
        $region52: #{tpu_custom_call.1} parent=43 // pred_fallthru
          _
        // Predicated region
        $region53: #{tpu_custom_call.1} parent=43 // pred_check
          %p350 = pneg %p101
        $region54: #{tpu_custom_call.1} parent=43 // pred_check_branch
          %352 = sbr.rel (%p350) target = $region56
        $region55: #{tpu_custom_call.1} parent=43 // pred_region
          %353 = dma.done [#allocation6], 1024
        $region56: #{tpu_custom_call.1} parent=43 // pred_fallthru
          _
        // Predicated region
        $region57: #{tpu_custom_call.1} parent=43 // pred_check
          %p354 = pneg %p122
        $region58: #{tpu_custom_call.1} parent=43 // pred_check_branch
          %356 = sbr.rel (%p354) target = $region60
        $region59: #{tpu_custom_call.1} parent=43 // pred_region
          %357 = dma.done [#allocation9], 16
        $region60: #{tpu_custom_call.1} parent=43 // pred_fallthru
          _
        // Predicated region
        $region61: #{tpu_custom_call.1} parent=43 // pred_check
          %p358 = pneg %p143
        $region62: #{tpu_custom_call.1} parent=43 // pred_check_branch
          %360 = sbr.rel (%p358) target = $region64
        $region63: #{tpu_custom_call.1} parent=43 // pred_region
          %361 = dma.done [#allocation9], 1024
        $region64: #{tpu_custom_call.1} parent=43 // pred_fallthru
          _
        // Predicated region
        $region65: #{tpu_custom_call.1} parent=43 // pred_check
          %p362 = pneg %p164
        $region66: #{tpu_custom_call.1} parent=43 // pred_check_branch
          %364 = sbr.rel (%p362) target = $region68
        $region67: #{tpu_custom_call.1} parent=43 // pred_region
          %365 = dma.done [#allocation12], 16
        $region68: #{tpu_custom_call.1} parent=43 // pred_fallthru
          _
        %s366 = sand.u32 %s41, 1
        %s367 = scalar_lea.sflag [#allocation3], %s366
        %s368 = sand.u32 %s41, 1
        %s369 = smul.addr %s368, 64
        %s370 = scalar_lea.vmem [#allocation2], %s369
        %p371 = pneg %p54
        %p372 = pneg %p51
        %s373 = sand.u32 %s33, 1
        %s374 = scalar_lea.sflag [#allocation6], %s373
        %s375 = sand.u32 %s67, 1
        %s376 = smul.addr %s375, 64
        %s377 = scalar_lea.vmem [#allocation5], %s376
        %p378 = pneg %p80
        %p379 = pneg %p77
        %p380 = pneg %p101
        %p381 = pneg %p98
        %p382 = pneg %p122
        %p383 = pneg %p119
        %p384 = pneg %p143
        %p385 = pneg %p140
        %p386 = pneg %p164
        %p387 = pneg %p161
        %p388 = pneg %p190
        %p389 = pneg %p187
        %s390 = sand.u32 %s177, 1
        %s391 = scalar_lea.sflag [#allocation4], %s390
        %s392 = sand.u32 %s177, 1
        %s393 = smul.addr %s392, 128
        %s394 = scalar_lea.vmem [#allocation13], %s393
        %p395 = pneg %p216
        %p396 = pneg %p213
        %s397 = sand.u32 %s203, 1
        %s398 = scalar_lea.sflag [#allocation15], %s397
        %s399 = sand.u32 %s203, 1
        %s400 = scalar_lea.vmem [#allocation14], %s399
        %v402 = vld [vmem:[%s336] sm:$0xf]
        %v403 = vld [vmem:[%s336 + $0x4] sm:$0xf]
        %v404 = vld [vmem:[%s336 + $0x8] sm:$0xf]
        %v405 = vld [vmem:[%s336 + $0xc] sm:$0xf]
        %v406 = vld [vmem:[%s336 + $0x10] sm:$0xf]
        %v407 = vld [vmem:[%s336 + $0x14] sm:$0xf]
        %v408 = vld [vmem:[%s336 + $0x18] sm:$0xf]
        %v409 = vld [vmem:[%s336 + $0x1c] sm:$0xf]
        %v410 = vld [vmem:[%s336 + $0x20] sm:$0xf]
        %v411 = vld [vmem:[%s336 + $0x24] sm:$0xf]
        %v412 = vld [vmem:[%s336 + $0x28] sm:$0xf]
        %v413 = vld [vmem:[%s336 + $0x2c] sm:$0xf]
        %v414 = vld [vmem:[%s336 + $0x30] sm:$0xf]
        %v415 = vld [vmem:[%s336 + $0x34] sm:$0xf]
        %v416 = vld [vmem:[%s336 + $0x38] sm:$0xf]
        %v417 = vld [vmem:[%s336 + $0x3c] sm:$0xf]
        %v418 = vld [vmem:[%s345] sm:$0xf]
        %v419 = vld [vmem:[%s345 + $0x4] sm:$0xf]
        %v420 = vld [vmem:[%s345 + $0x8] sm:$0xf]
        %v421 = vld [vmem:[%s345 + $0xc] sm:$0xf]
        %v422 = vld [vmem:[%s345 + $0x10] sm:$0xf]
        %v423 = vld [vmem:[%s345 + $0x14] sm:$0xf]
        %v424 = vld [vmem:[%s345 + $0x18] sm:$0xf]
        %v425 = vld [vmem:[%s345 + $0x1c] sm:$0xf]
        %v426 = vld [vmem:[%s345 + $0x20] sm:$0xf]
        %v427 = vld [vmem:[%s345 + $0x24] sm:$0xf]
        %v428 = vld [vmem:[%s345 + $0x28] sm:$0xf]
        %v429 = vld [vmem:[%s345 + $0x2c] sm:$0xf]
        %v430 = vld [vmem:[%s345 + $0x30] sm:$0xf]
        %v431 = vld [vmem:[%s345 + $0x34] sm:$0xf]
        %v432 = vld [vmem:[%s345 + $0x38] sm:$0xf]
        %v433 = vld [vmem:[%s345 + $0x3c] sm:$0xf]
        %v434 = vld [vmem:[#allocation7] sm:$0xf]
        %v435 = vld [vmem:[#allocation7 + $0x4] sm:$0xf]
        %v436 = vld [vmem:[#allocation7 + $0x8] sm:$0xf]
        %v437 = vld [vmem:[#allocation7 + $0xc] sm:$0xf]
        %v438 = vld [vmem:[#allocation7 + $0x10] sm:$0xf]
        %v439 = vld [vmem:[#allocation7 + $0x14] sm:$0xf]
        %v440 = vld [vmem:[#allocation7 + $0x18] sm:$0xf]
        %v441 = vld [vmem:[#allocation7 + $0x1c] sm:$0xf]
        %v442 = vld [vmem:[#allocation7 + $0x20] sm:$0xf]
        %v443 = vld [vmem:[#allocation7 + $0x24] sm:$0xf]
        %v444 = vld [vmem:[#allocation7 + $0x28] sm:$0xf]
        %v445 = vld [vmem:[#allocation7 + $0x2c] sm:$0xf]
        %v446 = vld [vmem:[#allocation7 + $0x30] sm:$0xf]
        %v447 = vld [vmem:[#allocation7 + $0x34] sm:$0xf]
        %v448 = vld [vmem:[#allocation7 + $0x38] sm:$0xf]
        %v449 = vld [vmem:[#allocation7 + $0x3c] sm:$0xf]
        %v450 = vld [vmem:[#allocation10] sm:$0xf]
        %v451 = vld [vmem:[#allocation10 + $0x4] sm:$0xf]
        %v452 = vld [vmem:[#allocation10 + $0x8] sm:$0xf]
        %v453 = vld [vmem:[#allocation10 + $0xc] sm:$0xf]
        %v454 = vld [vmem:[#allocation10 + $0x10] sm:$0xf]
        %v455 = vld [vmem:[#allocation10 + $0x14] sm:$0xf]
        %v456 = vld [vmem:[#allocation10 + $0x18] sm:$0xf]
        %v457 = vld [vmem:[#allocation10 + $0x1c] sm:$0xf]
        %v458 = vld [vmem:[#allocation10 + $0x20] sm:$0xf]
        %v459 = vld [vmem:[#allocation10 + $0x24] sm:$0xf]
        %v460 = vld [vmem:[#allocation10 + $0x28] sm:$0xf]
        %v461 = vld [vmem:[#allocation10 + $0x2c] sm:$0xf]
        %v462 = vld [vmem:[#allocation10 + $0x30] sm:$0xf]
        %v463 = vld [vmem:[#allocation10 + $0x34] sm:$0xf]
        %v464 = vld [vmem:[#allocation10 + $0x38] sm:$0xf]
        %v465 = vld [vmem:[#allocation10 + $0x3c] sm:$0xf]
        %v482 = vunpack.c.l.b16 %v402
        %v483 = vunpack.c.l.b16 %v403
        %v484 = vunpack.c.l.b16 %v404
        %v485 = vunpack.c.l.b16 %v405
        %v486 = vunpack.c.l.b16 %v406
        %v487 = vunpack.c.l.b16 %v407
        %v488 = vunpack.c.l.b16 %v408
        %v489 = vunpack.c.l.b16 %v409
        %v490 = vunpack.c.l.b16 %v410
        %v491 = vunpack.c.l.b16 %v411
        %v492 = vunpack.c.l.b16 %v412
        %v493 = vunpack.c.l.b16 %v413
        %v494 = vunpack.c.l.b16 %v414
        %v495 = vunpack.c.l.b16 %v415
        %v496 = vunpack.c.l.b16 %v416
        %v497 = vunpack.c.l.b16 %v417
        %v498 = vpack.c.b16 %v483, %v482
        %v499 = vpack.c.b16 %v485, %v484
        %v500 = vpack.c.b16 %v487, %v486
        %v501 = vpack.c.b16 %v489, %v488
        %v502 = vpack.c.b16 %v491, %v490
        %v503 = vpack.c.b16 %v493, %v492
        %v504 = vpack.c.b16 %v495, %v494
        %v505 = vpack.c.b16 %v497, %v496
        %v530 = vunpack.c.l.b16 %v418
        %v531 = vunpack.c.l.b16 %v419
        %v532 = vunpack.c.l.b16 %v420
        %v533 = vunpack.c.l.b16 %v421
        %v534 = vunpack.c.l.b16 %v422
        %v535 = vunpack.c.l.b16 %v423
        %v536 = vunpack.c.l.b16 %v424
        %v537 = vunpack.c.l.b16 %v425
        %v538 = vunpack.c.l.b16 %v426
        %v539 = vunpack.c.l.b16 %v427
        %v540 = vunpack.c.l.b16 %v428
        %v541 = vunpack.c.l.b16 %v429
        %v542 = vunpack.c.l.b16 %v430
        %v543 = vunpack.c.l.b16 %v431
        %v544 = vunpack.c.l.b16 %v432
        %v545 = vunpack.c.l.b16 %v433
        %v546 = vpack.c.b16 %v531, %v530
        %v547 = vpack.c.b16 %v533, %v532
        %v548 = vpack.c.b16 %v535, %v534
        %v549 = vpack.c.b16 %v537, %v536
        %v550 = vpack.c.b16 %v539, %v538
        %v551 = vpack.c.b16 %v541, %v540
        %v552 = vpack.c.b16 %v543, %v542
        %v553 = vpack.c.b16 %v545, %v544
        %562 = vmatprep.subr.bf16.mxu0 0
        %563 = vmatpush1.bf16.msra.mxu0 %v546
        %564 = vmatprep.subr.bf16.mxu0 0
        %565 = vmatpush1.bf16.msra.mxu0 %v547
        %566 = vmatprep.subr.bf16.mxu0 0
        %567 = vmatpush1.bf16.msra.mxu0 %v548
        %568 = vmatprep.subr.bf16.mxu0 0
        %569 = vmatpush1.bf16.msra.mxu0 %v549
        %570 = vmatprep.subr.bf16.mxu0 0
        %571 = vmatpush1.bf16.msra.mxu0 %v550
        %572 = vmatprep.subr.bf16.mxu0 0
        %573 = vmatpush1.bf16.msra.mxu0 %v551
        %574 = vmatprep.subr.bf16.mxu0 0
        %575 = vmatpush1.bf16.msra.mxu0 %v552
        %576 = vmatprep.subr.bf16.mxu0 0
        %577 = vmatpush1.bf16.msra.mxu0 %v553
        %578 = vmatprep.subr.bf16.mxu0 0
        %579 = vmatpush1.bf16.msra.mxu0 0
        %580 = vmatprep.subr.bf16.mxu0 0
        %581 = vmatpush1.bf16.msra.mxu0 0
        %582 = vmatprep.subr.bf16.mxu0 0
        %583 = vmatpush1.bf16.msra.mxu0 0
        %584 = vmatprep.subr.bf16.mxu0 0
        %585 = vmatpush1.bf16.msra.mxu0 0
        %586 = vmatprep.subr.bf16.mxu0 0
        %587 = vmatpush1.bf16.msra.mxu0 0
        %588 = vmatprep.subr.bf16.mxu0 0
        %589 = vmatpush1.bf16.msra.mxu0 0
        %590 = vmatprep.subr.bf16.mxu0 0
        %591 = vmatpush1.bf16.msra.mxu0 0
        %592 = vmatprep.subr.bf16.mxu0 0
        %593 = vmatpush1.bf16.msra.mxu0 0
        %594 = vmatprep.mubr.bf16.mxu0 0
        %595 = vmatmul.mubr.bf16.gmra.mrb[0].mxu0 %v498
        %v596 = vpop.f32.mrb[0].mxu0
        %v597 = vadd.f32 0.0, %v596
        %v598 = vpop.f32.mrb[0].mxu0
        %v599 = vpop.f32.mrb[0].mxu0
        %v600 = vadd.f32 0.0, %v599
        %v601 = vpop.f32.mrb[0].mxu0
        %602 = vmatprep.mubr.bf16.mxu0 0
        %603 = vmatmul.mubr.bf16.gmra.mrb[0].mxu0 %v499
        %v604 = vpop.f32.mrb[0].mxu0
        %v605 = vadd.f32 0.0, %v604
        %v606 = vpop.f32.mrb[0].mxu0
        %v607 = vpop.f32.mrb[0].mxu0
        %v608 = vadd.f32 0.0, %v607
        %v609 = vpop.f32.mrb[0].mxu0
        %610 = vmatprep.mubr.bf16.mxu0 0
        %611 = vmatmul.mubr.bf16.gmra.mrb[0].mxu0 %v500
        %v612 = vpop.f32.mrb[0].mxu0
        %v613 = vadd.f32 0.0, %v612
        %v614 = vpop.f32.mrb[0].mxu0
        %v615 = vpop.f32.mrb[0].mxu0
        %v616 = vadd.f32 0.0, %v615
        %v617 = vpop.f32.mrb[0].mxu0
        %618 = vmatprep.mubr.bf16.mxu0 0
        %619 = vmatmul.mubr.bf16.gmra.mrb[0].mxu0 %v501
        %v620 = vpop.f32.mrb[0].mxu0
        %v621 = vadd.f32 0.0, %v620
        %v622 = vpop.f32.mrb[0].mxu0
        %v623 = vpop.f32.mrb[0].mxu0
        %v624 = vadd.f32 0.0, %v623
        %v625 = vpop.f32.mrb[0].mxu0
        %626 = vmatprep.mubr.bf16.mxu0 0
        %627 = vmatmul.mubr.bf16.gmra.mrb[0].mxu0 %v502
        %v628 = vpop.f32.mrb[0].mxu0
        %v629 = vadd.f32 0.0, %v628
        %v630 = vpop.f32.mrb[0].mxu0
        %v631 = vpop.f32.mrb[0].mxu0
        %v632 = vadd.f32 0.0, %v631
        %v633 = vpop.f32.mrb[0].mxu0
        %634 = vmatprep.mubr.bf16.mxu0 0
        %635 = vmatmul.mubr.bf16.gmra.mrb[0].mxu0 %v503
        %v636 = vpop.f32.mrb[0].mxu0
        %v637 = vadd.f32 0.0, %v636
        %v638 = vpop.f32.mrb[0].mxu0
        %v639 = vpop.f32.mrb[0].mxu0
        %v640 = vadd.f32 0.0, %v639
        %v641 = vpop.f32.mrb[0].mxu0
        %642 = vmatprep.mubr.bf16.mxu0 0
        %643 = vmatmul.mubr.bf16.gmra.mrb[0].mxu0 %v504
        %v644 = vpop.f32.mrb[0].mxu0
        %v645 = vadd.f32 0.0, %v644
        %v646 = vpop.f32.mrb[0].mxu0
        %v647 = vpop.f32.mrb[0].mxu0
        %v648 = vadd.f32 0.0, %v647
        %v649 = vpop.f32.mrb[0].mxu0
        %650 = vmatprep.mubr.bf16.mxu0 0
        %651 = vmatmul.mubr.bf16.gmra.mrb[0].mxu0 %v505
        %v652 = vpop.f32.mrb[0].mxu0
        %v653 = vadd.f32 0.0, %v652
        %v654 = vpop.f32.mrb[0].mxu0
        %v655 = vpop.f32.mrb[0].mxu0
        %v656 = vadd.f32 0.0, %v655
        %v657 = vpop.f32.mrb[0].mxu0
        %658 = vdwg.mxu0
        %v659 = vpack.c.bf16 %v600, %v597
        %v660 = vpack.c.bf16 %v608, %v605
        %v661 = vpack.c.bf16 %v616, %v613
        %v662 = vpack.c.bf16 %v624, %v621
        %v663 = vpack.c.bf16 %v632, %v629
        %v664 = vpack.c.bf16 %v640, %v637
        %v665 = vpack.c.bf16 %v648, %v645
        %v666 = vpack.c.bf16 %v656, %v653
        %v667 = vld [vmem:[#allocation8] sm:$0x1]
        %v669 = vlaneseq
        %v670 = vshrl.u32 %v669, 7
        %v671 = vsub.s32 0, %v670
        %v672 = vrot.slane %v667, %v671
        %v690 = vunpack.c.l.b16 %v434
        %v691 = vunpack.c.l.b16 %v435
        %v692 = vunpack.c.l.b16 %v436
        %v693 = vunpack.c.l.b16 %v437
        %v694 = vunpack.c.l.b16 %v438
        %v695 = vunpack.c.l.b16 %v439
        %v696 = vunpack.c.l.b16 %v440
        %v697 = vunpack.c.l.b16 %v441
        %v698 = vunpack.c.l.b16 %v442
        %v699 = vunpack.c.l.b16 %v443
        %v700 = vunpack.c.l.b16 %v444
        %v701 = vunpack.c.l.b16 %v445
        %v702 = vunpack.c.l.b16 %v446
        %v703 = vunpack.c.l.b16 %v447
        %v704 = vunpack.c.l.b16 %v448
        %v705 = vunpack.c.l.b16 %v449
        %v706 = vpack.c.b16 %v691, %v690
        %v707 = vpack.c.b16 %v693, %v692
        %v708 = vpack.c.b16 %v695, %v694
        %v709 = vpack.c.b16 %v697, %v696
        %v710 = vpack.c.b16 %v699, %v698
        %v711 = vpack.c.b16 %v701, %v700
        %v712 = vpack.c.b16 %v703, %v702
        %v713 = vpack.c.b16 %v705, %v704
        %722 = vmatprep.subr.bf16.mxu0 0
        %723 = vmatpush1.bf16.msra.mxu0 %v706
        %724 = vmatprep.subr.bf16.mxu0 0
        %725 = vmatpush1.bf16.msra.mxu0 %v707
        %726 = vmatprep.subr.bf16.mxu0 0
        %727 = vmatpush1.bf16.msra.mxu0 %v708
        %728 = vmatprep.subr.bf16.mxu0 0
        %729 = vmatpush1.bf16.msra.mxu0 %v709
        %730 = vmatprep.subr.bf16.mxu0 0
        %731 = vmatpush1.bf16.msra.mxu0 %v710
        %732 = vmatprep.subr.bf16.mxu0 0
        %733 = vmatpush1.bf16.msra.mxu0 %v711
        %734 = vmatprep.subr.bf16.mxu0 0
        %735 = vmatpush1.bf16.msra.mxu0 %v712
        %736 = vmatprep.subr.bf16.mxu0 0
        %737 = vmatpush1.bf16.msra.mxu0 %v713
        %738 = vmatprep.subr.bf16.mxu0 0
        %739 = vmatpush1.bf16.msra.mxu0 0
        %740 = vmatprep.subr.bf16.mxu0 0
        %741 = vmatpush1.bf16.msra.mxu0 0
        %742 = vmatprep.subr.bf16.mxu0 0
        %743 = vmatpush1.bf16.msra.mxu0 0
        %744 = vmatprep.subr.bf16.mxu0 0
        %745 = vmatpush1.bf16.msra.mxu0 0
        %746 = vmatprep.subr.bf16.mxu0 0
        %747 = vmatpush1.bf16.msra.mxu0 0
        %748 = vmatprep.subr.bf16.mxu0 0
        %749 = vmatpush1.bf16.msra.mxu0 0
        %750 = vmatprep.subr.bf16.mxu0 0
        %751 = vmatpush1.bf16.msra.mxu0 0
        %752 = vmatprep.subr.bf16.mxu0 0
        %753 = vmatpush1.bf16.msra.mxu0 0
        %754 = vmatprep.mubr.bf16.mxu0 0
        %755 = vmatmul.mubr.bf16.gmra.mrb[0].mxu0 %v659
        %v756 = vpop.f32.mrb[0].mxu0
        %v757 = vadd.f32 %v672, %v756
        %v758 = vpop.f32.mrb[0].mxu0
        %v759 = vpop.f32.mrb[0].mxu0
        %v760 = vadd.f32 %v672, %v759
        %v761 = vpop.f32.mrb[0].mxu0
        %762 = vmatprep.mubr.bf16.mxu0 0
        %763 = vmatmul.mubr.bf16.gmra.mrb[0].mxu0 %v660
        %v764 = vpop.f32.mrb[0].mxu0
        %v765 = vadd.f32 %v672, %v764
        %v766 = vpop.f32.mrb[0].mxu0
        %v767 = vpop.f32.mrb[0].mxu0
        %v768 = vadd.f32 %v672, %v767
        %v769 = vpop.f32.mrb[0].mxu0
        %770 = vmatprep.mubr.bf16.mxu0 0
        %771 = vmatmul.mubr.bf16.gmra.mrb[0].mxu0 %v661
        %v772 = vpop.f32.mrb[0].mxu0
        %v773 = vadd.f32 %v672, %v772
        %v774 = vpop.f32.mrb[0].mxu0
        %v775 = vpop.f32.mrb[0].mxu0
        %v776 = vadd.f32 %v672, %v775
        %v777 = vpop.f32.mrb[0].mxu0
        %778 = vmatprep.mubr.bf16.mxu0 0
        %779 = vmatmul.mubr.bf16.gmra.mrb[0].mxu0 %v662
        %v780 = vpop.f32.mrb[0].mxu0
        %v781 = vadd.f32 %v672, %v780
        %v782 = vpop.f32.mrb[0].mxu0
        %v783 = vpop.f32.mrb[0].mxu0
        %v784 = vadd.f32 %v672, %v783
        %v785 = vpop.f32.mrb[0].mxu0
        %786 = vmatprep.mubr.bf16.mxu0 0
        %787 = vmatmul.mubr.bf16.gmra.mrb[0].mxu0 %v663
        %v788 = vpop.f32.mrb[0].mxu0
        %v789 = vadd.f32 %v672, %v788
        %v790 = vpop.f32.mrb[0].mxu0
        %v791 = vpop.f32.mrb[0].mxu0
        %v792 = vadd.f32 %v672, %v791
        %v793 = vpop.f32.mrb[0].mxu0
        %794 = vmatprep.mubr.bf16.mxu0 0
        %795 = vmatmul.mubr.bf16.gmra.mrb[0].mxu0 %v664
        %v796 = vpop.f32.mrb[0].mxu0
        %v797 = vadd.f32 %v672, %v796
        %v798 = vpop.f32.mrb[0].mxu0
        %v799 = vpop.f32.mrb[0].mxu0
        %v800 = vadd.f32 %v672, %v799
        %v801 = vpop.f32.mrb[0].mxu0
        %802 = vmatprep.mubr.bf16.mxu0 0
        %803 = vmatmul.mubr.bf16.gmra.mrb[0].mxu0 %v665
        %v804 = vpop.f32.mrb[0].mxu0
        %v805 = vadd.f32 %v672, %v804
        %v806 = vpop.f32.mrb[0].mxu0
        %v807 = vpop.f32.mrb[0].mxu0
        %v808 = vadd.f32 %v672, %v807
        %v809 = vpop.f32.mrb[0].mxu0
        %810 = vmatprep.mubr.bf16.mxu0 0
        %811 = vmatmul.mubr.bf16.gmra.mrb[0].mxu0 %v666
        %v812 = vpop.f32.mrb[0].mxu0
        %v813 = vadd.f32 %v672, %v812
        %v814 = vpop.f32.mrb[0].mxu0
        %v815 = vpop.f32.mrb[0].mxu0
        %v816 = vadd.f32 %v672, %v815
        %v817 = vpop.f32.mrb[0].mxu0
        %818 = vdwg.mxu0
        %v819 = vmax.f32 %v757, 0.0
        %v820 = vmax.f32 %v760, 0.0
        %v821 = vmax.f32 %v765, 0.0
        %v822 = vmax.f32 %v768, 0.0
        %v823 = vmax.f32 %v773, 0.0
        %v824 = vmax.f32 %v776, 0.0
        %v825 = vmax.f32 %v781, 0.0
        %v826 = vmax.f32 %v784, 0.0
        %v827 = vmax.f32 %v789, 0.0
        %v828 = vmax.f32 %v792, 0.0
        %v829 = vmax.f32 %v797, 0.0
        %v830 = vmax.f32 %v800, 0.0
        %v831 = vmax.f32 %v805, 0.0
        %v832 = vmax.f32 %v808, 0.0
        %v833 = vmax.f32 %v813, 0.0
        %v834 = vmax.f32 %v816, 0.0
        %v835 = vpack.c.bf16 %v820, %v819
        %v836 = vpack.c.bf16 %v822, %v821
        %v837 = vpack.c.bf16 %v824, %v823
        %v838 = vpack.c.bf16 %v826, %v825
        %v839 = vpack.c.bf16 %v828, %v827
        %v840 = vpack.c.bf16 %v830, %v829
        %v841 = vpack.c.bf16 %v832, %v831
        %v842 = vpack.c.bf16 %v834, %v833
        %843 = vmatprep.subr.bf16.mxu0 0
        %844 = vmatpush1.bf16.msra.mxu0 %v835
        %845 = vmatprep.subr.bf16.mxu0 0
        %846 = vmatpush1.bf16.msra.mxu0 %v836
        %847 = vmatprep.subr.bf16.mxu0 0
        %848 = vmatpush1.bf16.msra.mxu0 %v837
        %849 = vmatprep.subr.bf16.mxu0 0
        %850 = vmatpush1.bf16.msra.mxu0 %v838
        %851 = vmatprep.subr.bf16.mxu0 0
        %852 = vmatpush1.bf16.msra.mxu0 %v839
        %853 = vmatprep.subr.bf16.mxu0 0
        %854 = vmatpush1.bf16.msra.mxu0 %v840
        %855 = vmatprep.subr.bf16.mxu0 0
        %856 = vmatpush1.bf16.msra.mxu0 %v841
        %857 = vmatprep.subr.bf16.mxu0 0
        %858 = vmatpush1.bf16.msra.mxu0 %v842
        %859 = vmatprep.subr.bf16.mxu0 0
        %860 = vmatpush1.bf16.msra.mxu0 0
        %861 = vmatprep.subr.bf16.mxu0 0
        %862 = vmatpush1.bf16.msra.mxu0 0
        %863 = vmatprep.subr.bf16.mxu0 0
        %864 = vmatpush1.bf16.msra.mxu0 0
        %865 = vmatprep.subr.bf16.mxu0 0
        %866 = vmatpush1.bf16.msra.mxu0 0
        %867 = vmatprep.subr.bf16.mxu0 0
        %868 = vmatpush1.bf16.msra.mxu0 0
        %869 = vmatprep.subr.bf16.mxu0 0
        %870 = vmatpush1.bf16.msra.mxu0 0
        %871 = vmatprep.subr.bf16.mxu0 0
        %872 = vmatpush1.bf16.msra.mxu0 0
        %873 = vmatprep.subr.bf16.mxu0 0
        %874 = vmatpush1.bf16.msra.mxu0 0
        %875 = vmatprep.mubr.bf16.mxu0 0
        %876 = vmatmul.mubr.bf16.gmra.mrb[0].mxu0 %v498
        %v877 = vpop.f32.mrb[0].mxu0
        %v878 = vadd.f32 0.0, %v877
        %v879 = vpop.f32.mrb[0].mxu0
        %v880 = vpop.f32.mrb[0].mxu0
        %v881 = vadd.f32 0.0, %v880
        %v882 = vpop.f32.mrb[0].mxu0
        %883 = vmatprep.mubr.bf16.mxu0 0
        %884 = vmatmul.mubr.bf16.gmra.mrb[0].mxu0 %v499
        %v885 = vpop.f32.mrb[0].mxu0
        %v886 = vadd.f32 0.0, %v885
        %v887 = vpop.f32.mrb[0].mxu0
        %v888 = vpop.f32.mrb[0].mxu0
        %v889 = vadd.f32 0.0, %v888
        %v890 = vpop.f32.mrb[0].mxu0
        %891 = vmatprep.mubr.bf16.mxu0 0
        %892 = vmatmul.mubr.bf16.gmra.mrb[0].mxu0 %v500
        %v893 = vpop.f32.mrb[0].mxu0
        %v894 = vadd.f32 0.0, %v893
        %v895 = vpop.f32.mrb[0].mxu0
        %v896 = vpop.f32.mrb[0].mxu0
        %v897 = vadd.f32 0.0, %v896
        %v898 = vpop.f32.mrb[0].mxu0
        %899 = vmatprep.mubr.bf16.mxu0 0
        %900 = vmatmul.mubr.bf16.gmra.mrb[0].mxu0 %v501
        %v901 = vpop.f32.mrb[0].mxu0
        %v902 = vadd.f32 0.0, %v901
        %v903 = vpop.f32.mrb[0].mxu0
        %v904 = vpop.f32.mrb[0].mxu0
        %v905 = vadd.f32 0.0, %v904
        %v906 = vpop.f32.mrb[0].mxu0
        %907 = vmatprep.mubr.bf16.mxu0 0
        %908 = vmatmul.mubr.bf16.gmra.mrb[0].mxu0 %v502
        %v909 = vpop.f32.mrb[0].mxu0
        %v910 = vadd.f32 0.0, %v909
        %v911 = vpop.f32.mrb[0].mxu0
        %v912 = vpop.f32.mrb[0].mxu0
        %v913 = vadd.f32 0.0, %v912
        %v914 = vpop.f32.mrb[0].mxu0
        %915 = vmatprep.mubr.bf16.mxu0 0
        %916 = vmatmul.mubr.bf16.gmra.mrb[0].mxu0 %v503
        %v917 = vpop.f32.mrb[0].mxu0
        %v918 = vadd.f32 0.0, %v917
        %v919 = vpop.f32.mrb[0].mxu0
        %v920 = vpop.f32.mrb[0].mxu0
        %v921 = vadd.f32 0.0, %v920
        %v922 = vpop.f32.mrb[0].mxu0
        %923 = vmatprep.mubr.bf16.mxu0 0
        %924 = vmatmul.mubr.bf16.gmra.mrb[0].mxu0 %v504
        %v925 = vpop.f32.mrb[0].mxu0
        %v926 = vadd.f32 0.0, %v925
        %v927 = vpop.f32.mrb[0].mxu0
        %v928 = vpop.f32.mrb[0].mxu0
        %v929 = vadd.f32 0.0, %v928
        %v930 = vpop.f32.mrb[0].mxu0
        %931 = vmatprep.mubr.bf16.mxu0 0
        %932 = vmatmul.mubr.bf16.gmra.mrb[0].mxu0 %v505
        %v933 = vpop.f32.mrb[0].mxu0
        %v934 = vadd.f32 0.0, %v933
        %v935 = vpop.f32.mrb[0].mxu0
        %v936 = vpop.f32.mrb[0].mxu0
        %v937 = vadd.f32 0.0, %v936
        %v938 = vpop.f32.mrb[0].mxu0
        %939 = vdwg.mxu0
        %v940 = vpack.c.bf16 %v881, %v878
        %v941 = vpack.c.bf16 %v889, %v886
        %v942 = vpack.c.bf16 %v897, %v894
        %v943 = vpack.c.bf16 %v905, %v902
        %v944 = vpack.c.bf16 %v913, %v910
        %v945 = vpack.c.bf16 %v921, %v918
        %v946 = vpack.c.bf16 %v929, %v926
        %v947 = vpack.c.bf16 %v937, %v934
        %v948 = vld [vmem:[#allocation11] sm:$0x1]
        %v950 = vlaneseq
        %v951 = vshrl.u32 %v950, 7
        %v952 = vsub.s32 0, %v951
        %v953 = vrot.slane %v948, %v952
        %v971 = vunpack.c.l.b16 %v450
        %v972 = vunpack.c.l.b16 %v451
        %v973 = vunpack.c.l.b16 %v452
        %v974 = vunpack.c.l.b16 %v453
        %v975 = vunpack.c.l.b16 %v454
        %v976 = vunpack.c.l.b16 %v455
        %v977 = vunpack.c.l.b16 %v456
        %v978 = vunpack.c.l.b16 %v457
        %v979 = vunpack.c.l.b16 %v458
        %v980 = vunpack.c.l.b16 %v459
        %v981 = vunpack.c.l.b16 %v460
        %v982 = vunpack.c.l.b16 %v461
        %v983 = vunpack.c.l.b16 %v462
        %v984 = vunpack.c.l.b16 %v463
        %v985 = vunpack.c.l.b16 %v464
        %v986 = vunpack.c.l.b16 %v465
        %v987 = vpack.c.b16 %v972, %v971
        %v988 = vpack.c.b16 %v974, %v973
        %v989 = vpack.c.b16 %v976, %v975
        %v990 = vpack.c.b16 %v978, %v977
        %v991 = vpack.c.b16 %v980, %v979
        %v992 = vpack.c.b16 %v982, %v981
        %v993 = vpack.c.b16 %v984, %v983
        %v994 = vpack.c.b16 %v986, %v985
        %1003 = vmatprep.subr.bf16.mxu0 0
        %1004 = vmatpush1.bf16.msra.mxu0 %v987
        %1005 = vmatprep.subr.bf16.mxu0 0
        %1006 = vmatpush1.bf16.msra.mxu0 %v988
        %1007 = vmatprep.subr.bf16.mxu0 0
        %1008 = vmatpush1.bf16.msra.mxu0 %v989
        %1009 = vmatprep.subr.bf16.mxu0 0
        %1010 = vmatpush1.bf16.msra.mxu0 %v990
        %1011 = vmatprep.subr.bf16.mxu0 0
        %1012 = vmatpush1.bf16.msra.mxu0 %v991
        %1013 = vmatprep.subr.bf16.mxu0 0
        %1014 = vmatpush1.bf16.msra.mxu0 %v992
        %1015 = vmatprep.subr.bf16.mxu0 0
        %1016 = vmatpush1.bf16.msra.mxu0 %v993
        %1017 = vmatprep.subr.bf16.mxu0 0
        %1018 = vmatpush1.bf16.msra.mxu0 %v994
        %1019 = vmatprep.subr.bf16.mxu0 0
        %1020 = vmatpush1.bf16.msra.mxu0 0
        %1021 = vmatprep.subr.bf16.mxu0 0
        %1022 = vmatpush1.bf16.msra.mxu0 0
        %1023 = vmatprep.subr.bf16.mxu0 0
        %1024 = vmatpush1.bf16.msra.mxu0 0
        %1025 = vmatprep.subr.bf16.mxu0 0
        %1026 = vmatpush1.bf16.msra.mxu0 0
        %1027 = vmatprep.subr.bf16.mxu0 0
        %1028 = vmatpush1.bf16.msra.mxu0 0
        %1029 = vmatprep.subr.bf16.mxu0 0
        %1030 = vmatpush1.bf16.msra.mxu0 0
        %1031 = vmatprep.subr.bf16.mxu0 0
        %1032 = vmatpush1.bf16.msra.mxu0 0
        %1033 = vmatprep.subr.bf16.mxu0 0
        %1034 = vmatpush1.bf16.msra.mxu0 0
        %1035 = vmatprep.mubr.bf16.mxu0 0
        %1036 = vmatmul.mubr.bf16.gmra.mrb[0].mxu0 %v940
        %v1037 = vpop.f32.mrb[0].mxu0
        %v1038 = vadd.f32 %v953, %v1037
        %v1039 = vpop.f32.mrb[0].mxu0
        %v1040 = vpop.f32.mrb[0].mxu0
        %v1041 = vadd.f32 %v953, %v1040
        %v1042 = vpop.f32.mrb[0].mxu0
        %1043 = vmatprep.mubr.bf16.mxu0 0
        %1044 = vmatmul.mubr.bf16.gmra.mrb[0].mxu0 %v941
        %v1045 = vpop.f32.mrb[0].mxu0
        %v1046 = vadd.f32 %v953, %v1045
        %v1047 = vpop.f32.mrb[0].mxu0
        %v1048 = vpop.f32.mrb[0].mxu0
        %v1049 = vadd.f32 %v953, %v1048
        %v1050 = vpop.f32.mrb[0].mxu0
        %1051 = vmatprep.mubr.bf16.mxu0 0
        %1052 = vmatmul.mubr.bf16.gmra.mrb[0].mxu0 %v942
        %v1053 = vpop.f32.mrb[0].mxu0
        %v1054 = vadd.f32 %v953, %v1053
        %v1055 = vpop.f32.mrb[0].mxu0
        %v1056 = vpop.f32.mrb[0].mxu0
        %v1057 = vadd.f32 %v953, %v1056
        %v1058 = vpop.f32.mrb[0].mxu0
        %1059 = vmatprep.mubr.bf16.mxu0 0
        %1060 = vmatmul.mubr.bf16.gmra.mrb[0].mxu0 %v943
        %v1061 = vpop.f32.mrb[0].mxu0
        %v1062 = vadd.f32 %v953, %v1061
        %v1063 = vpop.f32.mrb[0].mxu0
        %v1064 = vpop.f32.mrb[0].mxu0
        %v1065 = vadd.f32 %v953, %v1064
        %v1066 = vpop.f32.mrb[0].mxu0
        %1067 = vmatprep.mubr.bf16.mxu0 0
        %1068 = vmatmul.mubr.bf16.gmra.mrb[0].mxu0 %v944
        %v1069 = vpop.f32.mrb[0].mxu0
        %v1070 = vadd.f32 %v953, %v1069
        %v1071 = vpop.f32.mrb[0].mxu0
        %v1072 = vpop.f32.mrb[0].mxu0
        %v1073 = vadd.f32 %v953, %v1072
        %v1074 = vpop.f32.mrb[0].mxu0
        %1075 = vmatprep.mubr.bf16.mxu0 0
        %1076 = vmatmul.mubr.bf16.gmra.mrb[0].mxu0 %v945
        %v1077 = vpop.f32.mrb[0].mxu0
        %v1078 = vadd.f32 %v953, %v1077
        %v1079 = vpop.f32.mrb[0].mxu0
        %v1080 = vpop.f32.mrb[0].mxu0
        %v1081 = vadd.f32 %v953, %v1080
        %v1082 = vpop.f32.mrb[0].mxu0
        %1083 = vmatprep.mubr.bf16.mxu0 0
        %1084 = vmatmul.mubr.bf16.gmra.mrb[0].mxu0 %v946
        %v1085 = vpop.f32.mrb[0].mxu0
        %v1086 = vadd.f32 %v953, %v1085
        %v1087 = vpop.f32.mrb[0].mxu0
        %v1088 = vpop.f32.mrb[0].mxu0
        %v1089 = vadd.f32 %v953, %v1088
        %v1090 = vpop.f32.mrb[0].mxu0
        %1091 = vmatprep.mubr.bf16.mxu0 0
        %1092 = vmatmul.mubr.bf16.gmra.mrb[0].mxu0 %v947
        %v1093 = vpop.f32.mrb[0].mxu0
        %v1094 = vadd.f32 %v953, %v1093
        %v1095 = vpop.f32.mrb[0].mxu0
        %v1096 = vpop.f32.mrb[0].mxu0
        %v1097 = vadd.f32 %v953, %v1096
        %v1098 = vpop.f32.mrb[0].mxu0
        %1099 = vdwg.mxu0
        %v1100 = vlaneseq
        %v1101 = vshrl.u32 %v1100, 7
        %v1102 = vadd.s32 %v1101, 8
        %v1103 = vadd.s32 %v1101, 16
        %v1104 = vadd.s32 %v1101, 24
        %v1105 = vadd.s32 %v1101, 32
        %v1106 = vadd.s32 %v1101, 40
        %v1107 = vadd.s32 %v1101, 48
        %v1108 = vadd.s32 %v1101, 56
        %v1109 = vadd.s32 %v1101, 64
        %v1110 = vadd.s32 %v1101, 72
        %v1111 = vadd.s32 %v1101, 80
        %v1112 = vadd.s32 %v1101, 88
        %v1113 = vadd.s32 %v1101, 96
        %v1114 = vadd.s32 %v1101, 104
        %v1115 = vadd.s32 %v1101, 112
        %v1116 = vadd.s32 %v1101, 120
        %vm1117 = vcmp.lt.s32.totalorder %v1101, 16
        %vm1118 = vcmp.lt.s32.totalorder %v1102, 16
        %vm1119 = vcmp.lt.s32.totalorder %v1103, 16
        %vm1120 = vcmp.lt.s32.totalorder %v1104, 16
        %vm1121 = vcmp.lt.s32.totalorder %v1105, 16
        %vm1122 = vcmp.lt.s32.totalorder %v1106, 16
        %vm1123 = vcmp.lt.s32.totalorder %v1107, 16
        %vm1124 = vcmp.lt.s32.totalorder %v1108, 16
        %vm1125 = vcmp.lt.s32.totalorder %v1109, 16
        %vm1126 = vcmp.lt.s32.totalorder %v1110, 16
        %vm1127 = vcmp.lt.s32.totalorder %v1111, 16
        %vm1128 = vcmp.lt.s32.totalorder %v1112, 16
        %vm1129 = vcmp.lt.s32.totalorder %v1113, 16
        %vm1130 = vcmp.lt.s32.totalorder %v1114, 16
        %vm1131 = vcmp.lt.s32.totalorder %v1115, 16
        %vm1132 = vcmp.lt.s32.totalorder %v1116, 16
        %v1133 = vsel %vm1117, %v1038, 0.0
        %v1134 = vsel %vm1118, %v1041, 0.0
        %v1135 = vsel %vm1119, %v1046, 0.0
        %v1136 = vsel %vm1120, %v1049, 0.0
        %v1137 = vsel %vm1121, %v1054, 0.0
        %v1138 = vsel %vm1122, %v1057, 0.0
        %v1139 = vsel %vm1123, %v1062, 0.0
        %v1140 = vsel %vm1124, %v1065, 0.0
        %v1141 = vsel %vm1125, %v1070, 0.0
        %v1142 = vsel %vm1126, %v1073, 0.0
        %v1143 = vsel %vm1127, %v1078, 0.0
        %v1144 = vsel %vm1128, %v1081, 0.0
        %v1145 = vsel %vm1129, %v1086, 0.0
        %v1146 = vsel %vm1130, %v1089, 0.0
        %v1147 = vsel %vm1131, %v1094, 0.0
        %v1148 = vsel %vm1132, %v1097, 0.0
        %1149 = vst [vmem:[%s394] sm:$0xff] %v1133
        %1150 = vst [vmem:[%s394 + $0x8] sm:$0xff] %v1134
        %1151 = vst [vmem:[%s394 + $0x10] sm:$0xff] %v1135
        %1152 = vst [vmem:[%s394 + $0x18] sm:$0xff] %v1136
        %1153 = vst [vmem:[%s394 + $0x20] sm:$0xff] %v1137
        %1154 = vst [vmem:[%s394 + $0x28] sm:$0xff] %v1138
        %1155 = vst [vmem:[%s394 + $0x30] sm:$0xff] %v1139
        %1156 = vst [vmem:[%s394 + $0x38] sm:$0xff] %v1140
        %1157 = vst [vmem:[%s394 + $0x40] sm:$0xff] %v1141
        %1158 = vst [vmem:[%s394 + $0x48] sm:$0xff] %v1142
        %1159 = vst [vmem:[%s394 + $0x50] sm:$0xff] %v1143
        %1160 = vst [vmem:[%s394 + $0x58] sm:$0xff] %v1144
        %1161 = vst [vmem:[%s394 + $0x60] sm:$0xff] %v1145
        %1162 = vst [vmem:[%s394 + $0x68] sm:$0xff] %v1146
        %1163 = vst [vmem:[%s394 + $0x70] sm:$0xff] %v1147
        %1164 = vst [vmem:[%s394 + $0x78] sm:$0xff] %v1148
        %v1165 = vadd.f32 %v1133, %v1134
        %v1166 = vadd.f32 %v1165, %v1135
        %v1167 = vadd.f32 %v1166, %v1136
        %v1168 = vadd.f32 %v1167, %v1137
        %v1169 = vadd.f32 %v1168, %v1138
        %v1170 = vadd.f32 %v1169, %v1139
        %v1171 = vadd.f32 %v1170, %v1140
        %v1172 = vadd.f32 %v1171, %v1141
        %v1173 = vadd.f32 %v1172, %v1142
        %v1174 = vadd.f32 %v1173, %v1143
        %v1175 = vadd.f32 %v1174, %v1144
        %v1176 = vadd.f32 %v1175, %v1145
        %v1177 = vadd.f32 %v1176, %v1146
        %v1178 = vadd.f32 %v1177, %v1147
        %v1179 = vadd.f32 %v1178, %v1148
        %v1180 = vrot.slane %v1179, 4
        %v1181 = vadd.f32 %v1179, %v1180
        %v1182 = vrot.slane %v1181, 2
        %v1183 = vadd.f32 %v1181, %v1182
        %v1184 = vrot.slane %v1183, 1
        %v1185 = vadd.f32 %v1183, %v1184
        %v1186 = vmul.f32 %v1185, 0.0625
        %1187 = vst [vmem:[%s400] sm:$0x1] %v1186
        %s1188 = sand.u32 %s177, 1
        %s1189 = scalar_lea.sflag [#allocation4], %s1188
        %s1190 = sand.u32 %s177, 1
        %s1191 = smul.addr %s1190, 128
        %s1192 = scalar_lea.vmem [#allocation13], %s1191
        %s1193 = sand.u32 %s203, 1
        %s1194 = scalar_lea.sflag [#allocation15], %s1193
        %s1195 = sand.u32 %s203, 1
        %s1196 = scalar_lea.vmem [#allocation14], %s1195
        // Predicated region
        $region69: #{tpu_custom_call.1} parent=43 // pred_check
          %p1197 = pneg %p187
        $region70: #{tpu_custom_call.1} parent=43 // pred_check_branch
          %1199 = sbr.rel (%p1197) target = $region72
        $region71: #{tpu_custom_call.1} parent=43 // pred_region
          %s1201 = ssub.s32 2048, 2048
          %1202 = vsyncadd %s1189, %s1201
          %s1203 = smul.addr %s33, 16
          %s1204 = smul.addr %s1203, 128
          %s1205 = scalar_lea.hbm %s6, %s1204
          %s1206 = sshll.u32 %s1192, 4
          %s1207 = int_to_ptr.vmem [resolvable:$true] %s1206
          %1212 = dma.vmem_to_hbm [thread:$0]  %s1207, 2048, %s1205, %s1189, 128, 128, 8
        $region72: #{tpu_custom_call.1} parent=43 // pred_fallthru
          _
        // Predicated region
        $region73: #{tpu_custom_call.1} parent=43 // pred_check
          %p1213 = pneg %p213
        $region74: #{tpu_custom_call.1} parent=43 // pred_check_branch
          %1215 = sbr.rel (%p1213) target = $region76
        $region75: #{tpu_custom_call.1} parent=43 // pred_region
          %s1217 = ssub.s32 16, 16
          %1218 = vsyncadd %s1194, %s1217
          %s1219 = smul.addr %s33, 16
          %s1220 = scalar_lea.hbm %s7, %s1219
          %s1222 = sshll.u32 %s1196, 4
          %s1223 = int_to_ptr.vmem [resolvable:$true] %s1222
          %1225 = dma.vmem_to_hbm [thread:$0]  %s1223, 16, %s1220, %s1194
        $region76: #{tpu_custom_call.1} parent=43 // pred_fallthru
          _
      $region44: #{tpu_custom_call.1} parent=5 // pred_fallthru
        _
      %p1226 = scmp.le.s32.totalorder 2, %s28
      // Predicated region
      $region77: #{tpu_custom_call.1} parent=5 // pred_check
        %p1227 = pneg %p1226
      $region78: #{tpu_custom_call.1} parent=5 // pred_check_branch
        %1229 = sbr.rel (%p1227) target = $region80
      $region79: #{tpu_custom_call.1} parent=5 // pred_region
        %s1230 = ssub.s32 %s28, 2
        // Predicated region
        $region81: #{tpu_custom_call.1} parent=79 // pred_check
          %p1231 = pneg %p193
        $region82: #{tpu_custom_call.1} parent=79 // pred_check_branch
          %1233 = sbr.rel (%p1231) target = $region84
        $region83: #{tpu_custom_call.1} parent=79 // pred_region
          %s1234 = sand.u32 %s178, 1
          %s1235 = scalar_lea.sflag [#allocation4], %s1234
          %s1236 = sand.u32 %s178, 1
          %s1237 = smul.addr %s1236, 128
          %s1238 = scalar_lea.vmem [#allocation13], %s1237
          %1239 = dma.done %s1235, 2048
        $region84: #{tpu_custom_call.1} parent=79 // pred_fallthru
          _
        // Predicated region
        $region85: #{tpu_custom_call.1} parent=79 // pred_check
          %p1240 = pneg %p219
        $region86: #{tpu_custom_call.1} parent=79 // pred_check_branch
          %1242 = sbr.rel (%p1240) target = $region88
        $region87: #{tpu_custom_call.1} parent=79 // pred_region
          %s1243 = sand.u32 %s204, 1
          %s1244 = scalar_lea.sflag [#allocation15], %s1243
          %s1245 = sand.u32 %s204, 1
          %s1246 = scalar_lea.vmem [#allocation14], %s1245
          %1247 = dma.done %s1244, 16
        $region88: #{tpu_custom_call.1} parent=79 // pred_fallthru
          _
      $region80: #{tpu_custom_call.1} parent=5 // pred_fallthru
        _
    $region6: #{tpu_custom_call.1} parent=1 // loop_footer
      %s32 = sadd.s32 1, %s28
    $region7: #{tpu_custom_call.1} parent=1 // loop_footer_branch
      %27 = sbr.rel target = $region3
    $region8: #{tpu_custom_call.1} parent=1 // loop_exit
      _
    %1248 = vsyncpa [#allocation3], 1
    %s1249 = scalar_lea.sflag [#allocation3], 1
    %1250 = vsyncpa %s1249, 1
    %1251 = vsyncpa [#allocation6], 1
    %s1252 = scalar_lea.sflag [#allocation6], 1
    %1253 = vsyncpa %s1252, 1
    %1254 = vsyncpa [#allocation9], 1
    %1255 = vsyncpa [#allocation12], 1
    %1256 = vsyncpa [#allocation4], 1
    %s1257 = scalar_lea.sflag [#allocation4], 1
    %1258 = vsyncpa %s1257, 1
    %1259 = vsyncpa [#allocation15], 1
    %s1260 = scalar_lea.sflag [#allocation15], 1
    %1261 = vsyncpa %s1260, 1

</llo_original>
